<compile_context>
chip_gen: v5e
topology: v5e:2x2
jax: 0.10.0
libtpu: 0.0.40
codegen_flags: <defaults>
</compile_context>

<pallas_src>
import functools

import jax
import jax.numpy as jnp
from jax import lax
from jax.experimental import pallas as pl
from jax.experimental.pallas import tpu as pltpu


def _obd_dropout_kernel(seed_ref, thr_ref, x_ref, o_ref):
    """One grid step: a (TR, TS) tile of the (N*C, H*W) view of x.

    seed_ref : SMEM (1,)     int32  -- scalar-prefetch seed
    thr_ref  : VMEM (TR, 1)  int32  -- per-row keep threshold = round(keep * 2^24)
    x_ref    : VMEM (TR, TS) f32
    o_ref    : VMEM (TR, TS) f32
    """
    tr, ts = x_ref.shape
    i = pl.program_id(0)
    j = pl.program_id(1)

    # Per-row / per-column linear hash contributions on cheap shapes; the only
    # full-tile mixing op before the finisher is one broadcast add.
    seed_mix = seed_ref[0].astype(jnp.uint32) * jnp.uint32(0xC2B2AE3D)
    row_ids = (lax.broadcasted_iota(jnp.int32, (tr, 1), 0) + i * tr).astype(jnp.uint32)
    col_ids = (lax.broadcasted_iota(jnp.int32, (1, ts), 1) + j * ts).astype(jnp.uint32)
    row_part = row_ids * jnp.uint32(0x9E3779B1) + seed_mix        # (TR, 1)
    col_part = col_ids * jnp.uint32(0x85EBCA77)                   # (1, TS)

    # Stateless counter-based hash (lowbias32 finisher) -> uniform 32-bit ints.
    h = row_part + col_part                                       # (TR, TS)
    h = h ^ (h >> 16)
    h = h * jnp.uint32(0x7FEB352D)
    h = h ^ (h >> 15)
    h = h * jnp.uint32(0x846CA68B)
    h = h ^ (h >> 16)

    # Top 24 bits -> uniform integer in [0, 2^24); keep iff below the per-row
    # threshold (pure integer compare, (TR,1) broadcast across lanes).
    bits24 = (h >> 8).astype(jnp.int32)
    keep = bits24 < thr_ref[...]
    o_ref[...] = jnp.where(keep, x_ref[...], 0.0).astype(o_ref.dtype)


def _choose_tiles(num_rows, num_cols):
    """Lane-dense (TR, TS) tile satisfying the (8, 128) rule, <= ~2 MiB f32."""
    ts = num_cols if num_cols <= 2048 else 2048            # mult of 128 or full dim
    if num_rows <= 8:
        tr = num_rows                                      # full second-to-last dim
    else:
        max_rows = max(8, ((2 << 20) // (ts * 4)) // 8 * 8)
        tr = min(max_rows, (num_rows // 8) * 8)            # multiple of 8
    return tr, ts


def optimal_brain_damage_dropout(
    x,                      # [N, C, H, W] float32
    saliency,               # [C] float32 per-feature saliency buffer
    seed,                   # int32 scalar
    initial_rate=0.1,
    max_rate=0.5,
    training=True,
):
    if not training:
        return x

    N, C, H, W = x.shape
    R, S = N * C, H * W

    # --- per-channel keep probabilities (tiny (C,) math, plain JAX) ----------
    min_v = saliency.min()
    max_v = saliency.max()
    # Reference divides by (max - min) and NaNs out for a constant saliency
    # buffer; guard so the kernel stays well defined.
    denom = jnp.where(max_v > min_v, max_v - min_v, jnp.float32(1.0))
    normalized = (saliency - min_v) / denom
    # Reference uses `self.max_grade` (typo for max_rate); we use max_rate.
    rates = initial_rate + (max_rate - initial_rate) * (1.0 - normalized)
    keep = jnp.clip(1.0 - rates, 0.0, 1.0).astype(jnp.float32)        # [C]

    # Row r of the (N*C, H*W) view is channel r % C  ->  tile keep over N.
    keep_rows = jnp.tile(keep, N)                                     # [R]
    thr = jnp.round(keep_rows * jnp.float32(1 << 24)).astype(jnp.int32)
    thr = thr.reshape(R, 1)                                           # [R, 1]

    # --- transpose-free layout: each NCHW channel plane is contiguous --------
    x2 = x.reshape(R, S)

    TR, TS = _choose_tiles(R, S)
    grid = (pl.cdiv(R, TR), pl.cdiv(S, TS))

    out2 = pl.pallas_call(
        _obd_dropout_kernel,
        out_shape=jax.ShapeDtypeStruct((R, S), x.dtype),
        grid_spec=pltpu.PrefetchScalarGridSpec(
            num_scalar_prefetch=1,                                    # seed -> SMEM
            grid=grid,
            in_specs=[
                pl.BlockSpec((TR, 1), lambda i, j, seed: (i, 0)),     # thresholds
                pl.BlockSpec((TR, TS), lambda i, j, seed: (i, j)),    # x tile
            ],
            out_specs=pl.BlockSpec((TR, TS), lambda i, j, seed: (i, j)),
        ),
        compiler_params=pltpu.CompilerParams(
            # Stateless hash -> tiles independent; lets v7x use both cores.
            dimension_semantics=("parallel", "parallel"),
        ),
        cost_estimate=pl.CostEstimate(
            flops=10 * x.size,
            transcendentals=0,
            bytes_accessed=2 * x.size * x.dtype.itemsize + R * 4,
        ),
    )(jnp.asarray(seed, jnp.int32).reshape(1), thr, x2)

    return out2.reshape(N, C, H, W)


# TODO(synk): the PyTorch module mutates x in place and relies on a stateful
# torch RNG; here the mask is a pure function of (seed, element coordinates).

if __name__ == "__main__":
    key = jax.random.PRNGKey(0)
    N, C, H, W = 2, 4, 16, 16
    x = jax.random.normal(key, (N, C, H, W), dtype=jnp.float32)

    # Non-degenerate saliency (the module's all-zeros init would divide by 0).
    saliency = jnp.arange(C, dtype=jnp.float32)

    fn = jax.jit(functools.partial(
        optimal_brain_damage_dropout,
        initial_rate=0.1, max_rate=0.5, training=True))
    out = fn(x, saliency, 0)
    jax.block_until_ready(out)

    assert out.shape == x.shape and out.dtype == x.dtype
    # Dropout semantics: each element is either zeroed or passed through.
    assert bool(jnp.all((out == 0.0) | (out == x)))
    # Sanity: at these rates (keep in [0.5, 0.9]) some elements are kept and
    # some are dropped.
    kept_frac = float(jnp.mean((out != 0.0).astype(jnp.float32)))
    assert 0.0 < kept_frac < 1.0
    print("KERNEL_OK")
</pallas_src>

<mosaic_0001>
module attributes {stable_mosaic.version = 11 : i64} {
  func.func @_obd_dropout_kernel(%arg0: i32, %arg1: i32, %arg2: memref<1xi32, #tpu.memory_space<smem>>, %arg3: memref<8x1xi32, #tpu.memory_space<vmem>>, %arg4: memref<8x256xf32, #tpu.memory_space<vmem>>, %arg5: memref<8x256xf32, #tpu.memory_space<vmem>>) attributes {dimension_semantics = [#tpu.dimension_semantics<parallel>, #tpu.dimension_semantics<parallel>], iteration_bounds = array<i64: 1, 1>, scalar_prefetch = 1 : i64, scratch_operands = 0 : i64, tpu.core_type = #tpu.core_type<tc>, window_params = [{transform_indices = @transform_0, window_bounds = array<i64: 8, 1>}, {transform_indices = @transform_1, window_bounds = array<i64: 8, 256>}, {transform_indices = @transform_2, window_bounds = array<i64: 8, 256>}]} {
    %c0 = arith.constant 0 : index
    %0 = memref.load %arg2[%c0] : memref<1xi32, #tpu.memory_space<smem>>
    %c-1028477379_i32 = arith.constant -1028477379 : i32
    %1 = arith.muli %0, %c-1028477379_i32 : i32
    %2 = tpu.iota {dimensions = array<i32: 0>} : vector<8x1xi32>
    %c8_i32 = arith.constant 8 : i32
    %3 = arith.muli %arg0, %c8_i32 : i32
    %4 = vector.broadcast %3 : i32 to vector<8x1xi32>
    %5 = arith.addi %2, %4 : vector<8x1xi32>
    %6 = tpu.iota {dimensions = array<i32: 1>} : vector<1x256xi32>
    %c256_i32 = arith.constant 256 : i32
    %7 = arith.muli %arg1, %c256_i32 : i32
    %8 = vector.broadcast %7 : i32 to vector<1x256xi32>
    %9 = arith.addi %6, %8 : vector<1x256xi32>
    %c-1640531535_i32 = arith.constant -1640531535 : i32
    %10 = vector.broadcast %c-1640531535_i32 : i32 to vector<8x1xi32>
    %11 = arith.muli %5, %10 : vector<8x1xi32>
    %12 = vector.broadcast %1 : i32 to vector<8x1xi32>
    %13 = arith.addi %11, %12 : vector<8x1xi32>
    %c-2048144777_i32 = arith.constant -2048144777 : i32
    %14 = vector.broadcast %c-2048144777_i32 : i32 to vector<1x256xi32>
    %15 = arith.muli %9, %14 : vector<1x256xi32>
    %16 = vector.broadcast %13 : vector<8x1xi32> to vector<8x256xi32>
    %17 = vector.broadcast %15 : vector<1x256xi32> to vector<8x256xi32>
    %18 = arith.addi %16, %17 : vector<8x256xi32>
    %c16_i32 = arith.constant 16 : i32
    %19 = vector.broadcast %c16_i32 : i32 to vector<8x256xi32>
    %20 = arith.shrui %18, %19 : vector<8x256xi32>
    %21 = arith.xori %18, %20 : vector<8x256xi32>
    %c2146121005_i32 = arith.constant 2146121005 : i32
    %22 = vector.broadcast %c2146121005_i32 : i32 to vector<8x256xi32>
    %23 = arith.muli %21, %22 : vector<8x256xi32>
    %c15_i32 = arith.constant 15 : i32
    %24 = vector.broadcast %c15_i32 : i32 to vector<8x256xi32>
    %25 = arith.shrui %23, %24 : vector<8x256xi32>
    %26 = arith.xori %23, %25 : vector<8x256xi32>
    %c-2073254261_i32 = arith.constant -2073254261 : i32
    %27 = vector.broadcast %c-2073254261_i32 : i32 to vector<8x256xi32>
    %28 = arith.muli %26, %27 : vector<8x256xi32>
    %c16_i32_0 = arith.constant 16 : i32
    %29 = vector.broadcast %c16_i32_0 : i32 to vector<8x256xi32>
    %30 = arith.shrui %28, %29 : vector<8x256xi32>
    %31 = arith.xori %28, %30 : vector<8x256xi32>
    %c8_i32_1 = arith.constant 8 : i32
    %32 = vector.broadcast %c8_i32_1 : i32 to vector<8x256xi32>
    %33 = arith.shrui %31, %32 : vector<8x256xi32>
    %c0_2 = arith.constant 0 : index
    %c0_3 = arith.constant 0 : index
    %34 = vector.load %arg3[%c0_2, %c0_3] : memref<8x1xi32, #tpu.memory_space<vmem>>, vector<8x1xi32>
    %35 = vector.broadcast %34 : vector<8x1xi32> to vector<8x256xi32>
    %36 = arith.cmpi slt, %33, %35 : vector<8x256xi32>
    %c0_4 = arith.constant 0 : index
    %c0_5 = arith.constant 0 : index
    %37 = vector.load %arg4[%c0_4, %c0_5] : memref<8x256xf32, #tpu.memory_space<vmem>>, vector<8x256xf32>
    %cst = arith.constant 0.000000e+00 : f32
    %38 = vector.broadcast %cst : f32 to vector<8x256xf32>
    %39 = arith.select %36, %37, %38 : vector<8x256xi1>, vector<8x256xf32>
    %c0_6 = arith.constant 0 : index
    %c0_7 = arith.constant 0 : index
    %40 = vector.load %arg5[%c0_6, %c0_7] : memref<8x256xf32, #tpu.memory_space<vmem>>, vector<8x256xf32>
    tpu.vector_store %arg5[%c0_6, %c0_7], %39 {strides = array<i32>} : memref<8x256xf32, #tpu.memory_space<vmem>>, vector<8x256xf32>,
    return
  }
  func.func @transform_0(%arg0: i32, %arg1: i32, %arg2: memref<1xi32, #tpu.memory_space<smem>>) -> (i32, i32) {
    %c0_i32 = arith.constant 0 : i32
    %c0_i32_0 = arith.constant 0 : i32
    return %arg0, %c0_i32 : i32, i32
  }
  func.func @transform_1(%arg0: i32, %arg1: i32, %arg2: memref<1xi32, #tpu.memory_space<smem>>) -> (i32, i32) {
    %c0_i32 = arith.constant 0 : i32
    return %arg0, %arg1 : i32, i32
  }
  func.func @transform_2(%arg0: i32, %arg1: i32, %arg2: memref<1xi32, #tpu.memory_space<smem>>) -> (i32, i32) {
    %c0_i32 = arith.constant 0 : i32
    return %arg0, %arg1 : i32, i32
  }
}

</mosaic_0001>

<llo_original>
// kernel: optimal_brain_damage_dropout.1
$region0: #{optimal_brain_damage_dropout.1}
  #allocation0 [shape = 'u32[]', space=smem, size = 0x4, offset = 0x4, fixed_abs, tag = 'smem constant byte address 0x4 - core index']
  #allocation1 [shape = 'u32[72,128]{1,0:T(1,128)}', space=vmem, size = 0x9000, scoped, tag = 'internal scratch']
  #allocation2 [shape = 's32[1]{0}', space=sflag, size = 0x4, scoped, tag = 'scoped memory for optimal_brain_damage_dropout.1']
  #allocation3 [shape = 's32[1]{0:T(128)S(6)}', space=smem, size = 0x200, scoped, tag = 'prefetched SMEM operand 0']
  %s0 = inlined_call_operand.<no memory space> [shape: s32[1], index: 0, kind: input, shape index: {}]
  %s1 = inlined_call_operand.vmem [shape: s32[8,1], index: 1, kind: input, shape index: {}]
  %s2 = inlined_call_operand.vmem [shape: f32[8,256], index: 2, kind: input, shape index: {}]
  %s3 = inlined_call_operand.vmem [shape: f32[8,256], index: 3, kind: output, shape index: {}]
  %s4 = sld [smem:[#allocation0]]
  $region18: #{optimal_brain_damage_dropout.1} parent=0
    _
  %s6 = ssub.s32 1, %s4
  %s7 = scalar_select 0, %s6, %s4
  %8 = sst [smem:[#allocation3]] %s0
  // Predicated region
  $region2: #{optimal_brain_damage_dropout.1} parent=0 // pred_check
    _
  $region3: #{optimal_brain_damage_dropout.1} parent=0 // pred_check_branch
    %10 = sbr.rel (0) target = $region5
  $region4: #{optimal_brain_damage_dropout.1} parent=0 // pred_region
    _
  $region5: #{optimal_brain_damage_dropout.1} parent=0 // pred_fallthru
    _
  // Predicated region
  $region6: #{optimal_brain_damage_dropout.1} parent=0 // pred_check
    _
  $region7: #{optimal_brain_damage_dropout.1} parent=0 // pred_check_branch
    %12 = sbr.rel (0) target = $region9
  $region8: #{optimal_brain_damage_dropout.1} parent=0 // pred_region
    _
  $region9: #{optimal_brain_damage_dropout.1} parent=0 // pred_fallthru
    _
  %s13 = sld [smem:[#allocation3]]
  %s14 = smul.u32 %s13, 3266489917
  %v15 = vlaneseq
  %v16 = vshrl.u32 %v15, 7
  %s17 = smul.u32 0, 8
  %v18 = vstv %s17
  %v19 = vadd.s32 %v16, %v18
  %v20 = vlaneseq
  %v21 = vand.u32 %v20, 127
  %v22 = vadd.s32 %v21, 128
  %s23 = smul.u32 0, 256
  %v24 = vstv %s23
  %v25 = vadd.s32 %v21, %v24
  %v26 = vadd.s32 %v22, %v24
  %v27 = vmul.u32 %v19, 2654435761
  %v28 = vstv %s14
  %v29 = vadd.s32 %v27, %v28
  %v30 = vmul.u32 %v25, 2246822519
  %v31 = vmul.u32 %v26, 2246822519
  %v32 = vadd.s32 %v29, %v30
  %v33 = vadd.s32 %v29, %v31
  %v34 = vshrl.u32 %v32, 16
  %v35 = vshrl.u32 %v33, 16
  %v36 = vxor.u32 %v32, %v34
  %v37 = vxor.u32 %v33, %v35
  %v38 = vmul.u32 %v36, 2146121005
  %v39 = vmul.u32 %v37, 2146121005
  %v40 = vshrl.u32 %v38, 15
  %v41 = vshrl.u32 %v39, 15
  %v42 = vxor.u32 %v38, %v40
  %v43 = vxor.u32 %v39, %v41
  %v44 = vmul.u32 %v42, 2221713035
  %v45 = vmul.u32 %v43, 2221713035
  %v46 = vshrl.u32 %v44, 16
  %v47 = vshrl.u32 %v45, 16
  %v48 = vxor.u32 %v44, %v46
  %v49 = vxor.u32 %v45, %v47
  %v50 = vshrl.u32 %v48, 8
  %v51 = vshrl.u32 %v49, 8
  %v52 = vld [vmem:[%s1] sm:$0xff]
  %53 = vset.pattern.permute.xlu0 0
  %54 = vperm.xlu0 %53, %v52
  %v55 = vpop.permute.xlu0 %54
  %vm56 = vcmp.lt.s32.totalorder %v50, %v55
  %vm57 = vcmp.lt.s32.totalorder %v51, %v55
  %v58 = vld [vmem:[%s2] sm:$0xff]
  %v59 = vld [vmem:[%s2 + $0x8] sm:$0xff]
  %v60 = vsel %vm56, %v58, 0.0
  %v61 = vsel %vm57, %v59, 0.0
  %62 = vst [vmem:[%s3] sm:$0xff] %v60
  %63 = vst [vmem:[%s3 + $0x8] sm:$0xff] %v61
  // Predicated region
  $region10: #{optimal_brain_damage_dropout.1} parent=0 // pred_check
    _
  $region11: #{optimal_brain_damage_dropout.1} parent=0 // pred_check_branch
    %65 = sbr.rel (0) target = $region13
  $region12: #{optimal_brain_damage_dropout.1} parent=0 // pred_region
    _
  $region13: #{optimal_brain_damage_dropout.1} parent=0 // pred_fallthru
    _
  // Predicated region
  $region14: #{optimal_brain_damage_dropout.1} parent=0 // pred_check
    _
  $region15: #{optimal_brain_damage_dropout.1} parent=0 // pred_check_branch
    %67 = sbr.rel (0) target = $region17
  $region16: #{optimal_brain_damage_dropout.1} parent=0 // pred_region
    _
  $region17: #{optimal_brain_damage_dropout.1} parent=0 // pred_fallthru
    _

</llo_original>
